<compile_context>
chip_gen: v6e
topology: v6e:2x2x1
jax: 0.10.0
libtpu: 0.0.40
codegen_flags: <defaults>
</compile_context>

<pallas_src>
import math

import jax
import jax.numpy as jnp
from jax.experimental import pallas as pl
from jax.experimental.pallas import tpu as pltpu


def teacher_f_kernel(feat_ref, imp_ref,
                     w1_ref, b1_ref, w2_ref, b2_ref,
                     w3_ref, b3_ref, w4_ref, b4_ref,
                     out_ref, h1_ref, m1_ref, m2_ref):
    x = feat_ref[...]

    # NaN imputation with the learnable imp_feat parameter.
    h1 = jnp.where(jnp.isnan(x), imp_ref[...], x)
    h1_ref[...] = h1

    # TODO(synk): nn.Dropout is identity in eval mode; training-mode dropout
    # (stochastic masking) is not applied here.
    h = h1

    # fm1
    m1 = jnp.dot(h, w1_ref[...], preferred_element_type=jnp.float32) + b1_ref[...]
    m1_ref[...] = m1

    # relu -> fm2
    h = jnp.maximum(m1, 0.0)
    h = jnp.dot(h, w2_ref[...], preferred_element_type=jnp.float32) + b2_ref[...]

    # relu -> fm3
    h = jnp.maximum(h, 0.0)
    m2 = jnp.dot(h, w3_ref[...], preferred_element_type=jnp.float32) + b3_ref[...]
    m2_ref[...] = m2

    # relu -> fm4
    h = jnp.maximum(m2, 0.0)
    out_ref[...] = jnp.dot(h, w4_ref[...], preferred_element_type=jnp.float32) + b4_ref[...]


def teacher_f_kernel_light(feat_ref, imp_ref,
                           w1_ref, b1_ref, w2_ref, b2_ref,
                           w3_ref, b3_ref, w4_ref, b4_ref,
                           out_ref):
    # Inference-only path: same math, no intermediate writebacks (~4x less
    # HBM output traffic).
    x = feat_ref[...]
    h = jnp.where(jnp.isnan(x), imp_ref[...], x)
    h = jnp.dot(h, w1_ref[...], preferred_element_type=jnp.float32) + b1_ref[...]
    h = jnp.maximum(h, 0.0)
    h = jnp.dot(h, w2_ref[...], preferred_element_type=jnp.float32) + b2_ref[...]
    h = jnp.maximum(h, 0.0)
    h = jnp.dot(h, w3_ref[...], preferred_element_type=jnp.float32) + b3_ref[...]
    h = jnp.maximum(h, 0.0)
    out_ref[...] = jnp.dot(h, w4_ref[...], preferred_element_type=jnp.float32) + b4_ref[...]


def _round_up(x, m):
    return ((x + m - 1) // m) * m


def teacher_f_forward(feature, params, *, return_intermediates=True,
                      block_rows=4096):
    """feature: [num_nodes, in_size] float32.

    Returns (h, h1, (m1, m2)) if return_intermediates else h only.
    """
    num_nodes, in_size = feature.shape
    hidden_size = params["w1"].shape[1]
    out_size = params["w4"].shape[1]

    # Row-tile size: large tiles maximize HBM utilization; clamp to the
    # (8-aligned) node count so tiny problems use a single grid step.
    tm = int(min(block_rows, _round_up(num_nodes, 8)))
    grid = (pl.cdiv(num_nodes, tm),)

    def row_spec(cols):
        return pl.BlockSpec((tm, cols), lambda i: (i, 0))

    def resident_spec(shape):
        # Constant index_map -> block stays resident in VMEM across grid steps.
        return pl.BlockSpec(shape, lambda i: (0, 0))

    in_specs = [
        row_spec(in_size),                        # feature
        row_spec(in_size),                        # imp_feat
        resident_spec((in_size, hidden_size)),    # w1
        resident_spec((1, hidden_size)),          # b1
        resident_spec((hidden_size, hidden_size)),# w2
        resident_spec((1, hidden_size)),          # b2
        resident_spec((hidden_size, hidden_size)),# w3
        resident_spec((1, hidden_size)),          # b3
        resident_spec((hidden_size, out_size)),   # w4
        resident_spec((1, out_size)),             # b4
    ]
    inputs = (feature, params["imp_feat"],
              params["w1"], params["b1"],
              params["w2"], params["b2"],
              params["w3"], params["b3"],
              params["w4"], params["b4"])

    if return_intermediates:
        kernel = teacher_f_kernel
        out_shapes = (
            jax.ShapeDtypeStruct((num_nodes, out_size), jnp.float32),     # h
            jax.ShapeDtypeStruct((num_nodes, in_size), jnp.float32),      # h1
            jax.ShapeDtypeStruct((num_nodes, hidden_size), jnp.float32),  # m1
            jax.ShapeDtypeStruct((num_nodes, hidden_size), jnp.float32),  # m2
        )
        out_specs = [
            row_spec(out_size),
            row_spec(in_size),
            row_spec(hidden_size),
            row_spec(hidden_size),
        ]
    else:
        kernel = teacher_f_kernel_light
        out_shapes = jax.ShapeDtypeStruct((num_nodes, out_size), jnp.float32)
        out_specs = row_spec(out_size)

    # Advisory cost estimate for XLA's scheduler.
    flops = 2 * num_nodes * (in_size * hidden_size
                             + 2 * hidden_size * hidden_size
                             + hidden_size * out_size)
    in_bytes = sum(int(math.prod(a.shape)) * a.dtype.itemsize for a in inputs)
    if return_intermediates:
        out_bytes = 4 * num_nodes * (out_size + in_size + 2 * hidden_size)
    else:
        out_bytes = 4 * num_nodes * out_size
    cost = pl.CostEstimate(flops=int(flops), transcendentals=0,
                           bytes_accessed=int(in_bytes + out_bytes))

    result = pl.pallas_call(
        kernel,
        out_shape=out_shapes,
        grid=grid,
        in_specs=in_specs,
        out_specs=out_specs,
        compiler_params=pltpu.CompilerParams(
            dimension_semantics=("parallel",),        # megacore split on v7x
            vmem_limit_bytes=32 * 1024 * 1024,        # explicit budget (v7x-safe)
        ),
        cost_estimate=cost,
    )(*inputs)

    if return_intermediates:
        h, h1, m1, m2 = result
        return h, h1, (m1, m2)
    return result


def xavier_normal(key, shape, gain):
    # shape = (fan_in, fan_out) since weights are stored pre-transposed.
    fan_in, fan_out = shape
    std = gain * math.sqrt(2.0 / (fan_in + fan_out))
    return std * jax.random.normal(key, shape, dtype=jnp.float32)


def init_params(key, num_nodes, in_size, hidden_size, out_size, num_layers=4):
    if num_layers == 1:
        hidden_size = out_size
    keys = jax.random.split(key, 6)
    gain = 1.414
    params = {
        "imp_feat": xavier_normal(keys[0], (num_nodes, in_size), gain),
        # Linear weights stored as [in, out] (transpose of PyTorch's [out, in]).
        "w1": xavier_normal(keys[1], (in_size, hidden_size), gain),
        "b1": jnp.zeros((1, hidden_size), jnp.float32),
        "w2": xavier_normal(keys[2], (hidden_size, hidden_size), gain),
        "b2": jnp.zeros((1, hidden_size), jnp.float32),
        "w3": xavier_normal(keys[3], (hidden_size, hidden_size), gain),
        "b3": jnp.zeros((1, hidden_size), jnp.float32),
        # fm4 uses PyTorch's default (uniform) init; deterministic normal is fine here.
        "w4": 0.05 * jax.random.normal(keys[4], (hidden_size, out_size), dtype=jnp.float32),
        "b4": 0.05 * jax.random.normal(keys[5], (1, out_size), dtype=jnp.float32),
    }
    return params


if __name__ == "__main__":
    num_nodes, in_size, hidden_size, out_size = 64, 32, 32, 16

    key = jax.random.PRNGKey(0)
    k_params, k_feat, k_mask = jax.random.split(key, 3)

    params = init_params(k_params, num_nodes, in_size, hidden_size, out_size)

    feature = jax.random.normal(k_feat, (num_nodes, in_size), dtype=jnp.float32)
    # Inject NaNs so the imputation path is exercised.
    nan_mask = jax.random.bernoulli(k_mask, 0.2, (num_nodes, in_size))
    feature = jnp.where(nan_mask, jnp.nan, feature)

    # Full path; block_rows=16 forces a multi-step grid even at this small size
    # so the row-tiled pipeline (and resident-weight BlockSpecs) are exercised.
    h, h1, (m1, m2) = teacher_f_forward(feature, params, block_rows=16)
    jax.block_until_ready((h, h1, m1, m2))

    # Inference-only path (no intermediate writebacks).
    h_light = teacher_f_forward(feature, params, return_intermediates=False,
                                block_rows=16)
    jax.block_until_ready(h_light)

    # Pure-JAX reference check.
    h1_ref = jnp.where(jnp.isnan(feature), params["imp_feat"], feature)
    r = h1_ref @ params["w1"] + params["b1"]
    m1_ref = r
    r = jnp.maximum(r, 0) @ params["w2"] + params["b2"]
    r = jnp.maximum(r, 0) @ params["w3"] + params["b3"]
    m2_ref = r
    h_ref = jnp.maximum(r, 0) @ params["w4"] + params["b4"]

    assert jnp.allclose(h, h_ref, atol=1e-5), "h mismatch"
    assert jnp.allclose(h1, h1_ref, atol=1e-6), "h1 mismatch"
    assert jnp.allclose(m1, m1_ref, atol=1e-5), "m1 mismatch"
    assert jnp.allclose(m2, m2_ref, atol=1e-5), "m2 mismatch"
    assert jnp.allclose(h_light, h_ref, atol=1e-5), "h (light path) mismatch"
    assert not jnp.any(jnp.isnan(h)), "NaNs leaked through imputation"

    print("KERNEL_OK")
</pallas_src>

<mosaic_0001>
module attributes {stable_mosaic.version = 11 : i64} {
  func.func @teacher_f_kernel(%arg0: i32, %arg1: memref<16x32xf32, #tpu.memory_space<vmem>>, %arg2: memref<16x32xf32, #tpu.memory_space<vmem>>, %arg3: memref<32x32xf32, #tpu.memory_space<vmem>>, %arg4: memref<1x32xf32, #tpu.memory_space<vmem>>, %arg5: memref<32x32xf32, #tpu.memory_space<vmem>>, %arg6: memref<1x32xf32, #tpu.memory_space<vmem>>, %arg7: memref<32x32xf32, #tpu.memory_space<vmem>>, %arg8: memref<1x32xf32, #tpu.memory_space<vmem>>, %arg9: memref<32x16xf32, #tpu.memory_space<vmem>>, %arg10: memref<1x16xf32, #tpu.memory_space<vmem>>, %arg11: memref<16x16xf32, #tpu.memory_space<vmem>>, %arg12: memref<16x32xf32, #tpu.memory_space<vmem>>, %arg13: memref<16x32xf32, #tpu.memory_space<vmem>>, %arg14: memref<16x32xf32, #tpu.memory_space<vmem>>) attributes {dimension_semantics = [#tpu.dimension_semantics<parallel>], iteration_bounds = array<i64: 4>, scalar_prefetch = 0 : i64, scratch_operands = 0 : i64, tpu.core_type = #tpu.core_type<tc>, window_params = [{transform_indices = @transform_0, window_bounds = array<i64: 16, 32>}, {transform_indices = @transform_1, window_bounds = array<i64: 16, 32>}, {pipeline_mode = #tpu.pipeline_mode<synchronous>, transform_indices = @transform_2, window_bounds = array<i64: 32, 32>}, {pipeline_mode = #tpu.pipeline_mode<synchronous>, transform_indices = @transform_3, window_bounds = array<i64: 1, 32>}, {pipeline_mode = #tpu.pipeline_mode<synchronous>, transform_indices = @transform_4, window_bounds = array<i64: 32, 32>}, {pipeline_mode = #tpu.pipeline_mode<synchronous>, transform_indices = @transform_5, window_bounds = array<i64: 1, 32>}, {pipeline_mode = #tpu.pipeline_mode<synchronous>, transform_indices = @transform_6, window_bounds = array<i64: 32, 32>}, {pipeline_mode = #tpu.pipeline_mode<synchronous>, transform_indices = @transform_7, window_bounds = array<i64: 1, 32>}, {pipeline_mode = #tpu.pipeline_mode<synchronous>, transform_indices = @transform_8, window_bounds = array<i64: 32, 16>}, {pipeline_mode = #tpu.pipeline_mode<synchronous>, transform_indices = @transform_9, window_bounds = array<i64: 1, 16>}, {transform_indices = @transform_10, window_bounds = array<i64: 16, 16>}, {transform_indices = @transform_11, window_bounds = array<i64: 16, 32>}, {transform_indices = @transform_12, window_bounds = array<i64: 16, 32>}, {transform_indices = @transform_13, window_bounds = array<i64: 16, 32>}]} {
    %c0 = arith.constant 0 : index
    %c0_0 = arith.constant 0 : index
    %0 = vector.load %arg1[%c0, %c0_0] : memref<16x32xf32, #tpu.memory_space<vmem>>, vector<16x32xf32>
    %1 = arith.cmpf one, %0, %0 : vector<16x32xf32>
    %c0_1 = arith.constant 0 : index
    %c0_2 = arith.constant 0 : index
    %2 = vector.load %arg2[%c0_1, %c0_2] : memref<16x32xf32, #tpu.memory_space<vmem>>, vector<16x32xf32>
    %3 = arith.select %1, %2, %0 : vector<16x32xi1>, vector<16x32xf32>
    %c0_3 = arith.constant 0 : index
    %c0_4 = arith.constant 0 : index
    %4 = vector.load %arg12[%c0_3, %c0_4] : memref<16x32xf32, #tpu.memory_space<vmem>>, vector<16x32xf32>
    tpu.vector_store %arg12[%c0_3, %c0_4], %3 {strides = array<i32>} : memref<16x32xf32, #tpu.memory_space<vmem>>, vector<16x32xf32>,
    %c0_5 = arith.constant 0 : index
    %c0_6 = arith.constant 0 : index
    %5 = vector.load %arg3[%c0_5, %c0_6] : memref<32x32xf32, #tpu.memory_space<vmem>>, vector<32x32xf32>
    %cst = arith.constant dense<0.000000e+00> : vector<16x32xf32>
    %6 = tpu.matmul %3, %5, %cst {dimension_numbers = #tpu.dot_dimension_numbers<[1], [0], [0], [1], [0, 0, 1, 1], [], []>} : vector<16x32xf32>, vector<32x32xf32>, vector<16x32xf32> -> vector<16x32xf32>
    %c0_7 = arith.constant 0 : index
    %c0_8 = arith.constant 0 : index
    %7 = vector.load %arg4[%c0_7, %c0_8] : memref<1x32xf32, #tpu.memory_space<vmem>>, vector<1x32xf32>
    %8 = vector.broadcast %7 : vector<1x32xf32> to vector<16x32xf32>
    %9 = arith.addf %6, %8 : vector<16x32xf32>
    %c0_9 = arith.constant 0 : index
    %c0_10 = arith.constant 0 : index
    %10 = vector.load %arg13[%c0_9, %c0_10] : memref<16x32xf32, #tpu.memory_space<vmem>>, vector<16x32xf32>
    tpu.vector_store %arg13[%c0_9, %c0_10], %9 {strides = array<i32>} : memref<16x32xf32, #tpu.memory_space<vmem>>, vector<16x32xf32>,
    %cst_11 = arith.constant 0.000000e+00 : f32
    %11 = vector.broadcast %cst_11 : f32 to vector<16x32xf32>
    %12 = arith.maximumf %9, %11 : vector<16x32xf32>
    %c0_12 = arith.constant 0 : index
    %c0_13 = arith.constant 0 : index
    %13 = vector.load %arg5[%c0_12, %c0_13] : memref<32x32xf32, #tpu.memory_space<vmem>>, vector<32x32xf32>
    %cst_14 = arith.constant dense<0.000000e+00> : vector<16x32xf32>
    %14 = tpu.matmul %12, %13, %cst_14 {dimension_numbers = #tpu.dot_dimension_numbers<[1], [0], [0], [1], [0, 0, 1, 1], [], []>} : vector<16x32xf32>, vector<32x32xf32>, vector<16x32xf32> -> vector<16x32xf32>
    %c0_15 = arith.constant 0 : index
    %c0_16 = arith.constant 0 : index
    %15 = vector.load %arg6[%c0_15, %c0_16] : memref<1x32xf32, #tpu.memory_space<vmem>>, vector<1x32xf32>
    %16 = vector.broadcast %15 : vector<1x32xf32> to vector<16x32xf32>
    %17 = arith.addf %14, %16 : vector<16x32xf32>
    %cst_17 = arith.constant 0.000000e+00 : f32
    %18 = vector.broadcast %cst_17 : f32 to vector<16x32xf32>
    %19 = arith.maximumf %17, %18 : vector<16x32xf32>
    %c0_18 = arith.constant 0 : index
    %c0_19 = arith.constant 0 : index
    %20 = vector.load %arg7[%c0_18, %c0_19] : memref<32x32xf32, #tpu.memory_space<vmem>>, vector<32x32xf32>
    %cst_20 = arith.constant dense<0.000000e+00> : vector<16x32xf32>
    %21 = tpu.matmul %19, %20, %cst_20 {dimension_numbers = #tpu.dot_dimension_numbers<[1], [0], [0], [1], [0, 0, 1, 1], [], []>} : vector<16x32xf32>, vector<32x32xf32>, vector<16x32xf32> -> vector<16x32xf32>
    %c0_21 = arith.constant 0 : index
    %c0_22 = arith.constant 0 : index
    %22 = vector.load %arg8[%c0_21, %c0_22] : memref<1x32xf32, #tpu.memory_space<vmem>>, vector<1x32xf32>
    %23 = vector.broadcast %22 : vector<1x32xf32> to vector<16x32xf32>
    %24 = arith.addf %21, %23 : vector<16x32xf32>
    %c0_23 = arith.constant 0 : index
    %c0_24 = arith.constant 0 : index
    %25 = vector.load %arg14[%c0_23, %c0_24] : memref<16x32xf32, #tpu.memory_space<vmem>>, vector<16x32xf32>
    tpu.vector_store %arg14[%c0_23, %c0_24], %24 {strides = array<i32>} : memref<16x32xf32, #tpu.memory_space<vmem>>, vector<16x32xf32>,
    %cst_25 = arith.constant 0.000000e+00 : f32
    %26 = vector.broadcast %cst_25 : f32 to vector<16x32xf32>
    %27 = arith.maximumf %24, %26 : vector<16x32xf32>
    %c0_26 = arith.constant 0 : index
    %c0_27 = arith.constant 0 : index
    %28 = vector.load %arg9[%c0_26, %c0_27] : memref<32x16xf32, #tpu.memory_space<vmem>>, vector<32x16xf32>
    %cst_28 = arith.constant dense<0.000000e+00> : vector<16x16xf32>
    %29 = tpu.matmul %27, %28, %cst_28 {dimension_numbers = #tpu.dot_dimension_numbers<[1], [0], [0], [1], [0, 0, 1, 1], [], []>} : vector<16x32xf32>, vector<32x16xf32>, vector<16x16xf32> -> vector<16x16xf32>
    %c0_29 = arith.constant 0 : index
    %c0_30 = arith.constant 0 : index
    %30 = vector.load %arg10[%c0_29, %c0_30] : memref<1x16xf32, #tpu.memory_space<vmem>>, vector<1x16xf32>
    %31 = vector.broadcast %30 : vector<1x16xf32> to vector<16x16xf32>
    %32 = arith.addf %29, %31 : vector<16x16xf32>
    %c0_31 = arith.constant 0 : index
    %c0_32 = arith.constant 0 : index
    %33 = vector.load %arg11[%c0_31, %c0_32] : memref<16x16xf32, #tpu.memory_space<vmem>>, vector<16x16xf32>
    tpu.vector_store %arg11[%c0_31, %c0_32], %32 {strides = array<i32>} : memref<16x16xf32, #tpu.memory_space<vmem>>, vector<16x16xf32>,
    return
  }
  func.func @transform_0(%arg0: i32) -> (i32, i32) {
    %c0_i32 = arith.constant 0 : i32
    %c0_i32_0 = arith.constant 0 : i32
    return %arg0, %c0_i32 : i32, i32
  }
  func.func @transform_1(%arg0: i32) -> (i32, i32) {
    %c0_i32 = arith.constant 0 : i32
    %c0_i32_0 = arith.constant 0 : i32
    return %arg0, %c0_i32 : i32, i32
  }
  func.func @transform_2(%arg0: i32) -> (i32, i32) {
    %c0_i32 = arith.constant 0 : i32
    %c0_i32_0 = arith.constant 0 : i32
    %c0_i32_1 = arith.constant 0 : i32
    return %c0_i32, %c0_i32_0 : i32, i32
  }
  func.func @transform_3(%arg0: i32) -> (i32, i32) {
    %c0_i32 = arith.constant 0 : i32
    %c0_i32_0 = arith.constant 0 : i32
    %c0_i32_1 = arith.constant 0 : i32
    return %c0_i32, %c0_i32_0 : i32, i32
  }
  func.func @transform_4(%arg0: i32) -> (i32, i32) {
    %c0_i32 = arith.constant 0 : i32
    %c0_i32_0 = arith.constant 0 : i32
    %c0_i32_1 = arith.constant 0 : i32
    return %c0_i32, %c0_i32_0 : i32, i32
  }
  func.func @transform_5(%arg0: i32) -> (i32, i32) {
    %c0_i32 = arith.constant 0 : i32
    %c0_i32_0 = arith.constant 0 : i32
    %c0_i32_1 = arith.constant 0 : i32
    return %c0_i32, %c0_i32_0 : i32, i32
  }
  func.func @transform_6(%arg0: i32) -> (i32, i32) {
    %c0_i32 = arith.constant 0 : i32
    %c0_i32_0 = arith.constant 0 : i32
    %c0_i32_1 = arith.constant 0 : i32
    return %c0_i32, %c0_i32_0 : i32, i32
  }
  func.func @transform_7(%arg0: i32) -> (i32, i32) {
    %c0_i32 = arith.constant 0 : i32
    %c0_i32_0 = arith.constant 0 : i32
    %c0_i32_1 = arith.constant 0 : i32
    return %c0_i32, %c0_i32_0 : i32, i32
  }
  func.func @transform_8(%arg0: i32) -> (i32, i32) {
    %c0_i32 = arith.constant 0 : i32
    %c0_i32_0 = arith.constant 0 : i32
    %c0_i32_1 = arith.constant 0 : i32
    return %c0_i32, %c0_i32_0 : i32, i32
  }
  func.func @transform_9(%arg0: i32) -> (i32, i32) {
    %c0_i32 = arith.constant 0 : i32
    %c0_i32_0 = arith.constant 0 : i32
    %c0_i32_1 = arith.constant 0 : i32
    return %c0_i32, %c0_i32_0 : i32, i32
  }
  func.func @transform_10(%arg0: i32) -> (i32, i32) {
    %c0_i32 = arith.constant 0 : i32
    %c0_i32_0 = arith.constant 0 : i32
    return %arg0, %c0_i32 : i32, i32
  }
  func.func @transform_11(%arg0: i32) -> (i32, i32) {
    %c0_i32 = arith.constant 0 : i32
    %c0_i32_0 = arith.constant 0 : i32
    return %arg0, %c0_i32 : i32, i32
  }
  func.func @transform_12(%arg0: i32) -> (i32, i32) {
    %c0_i32 = arith.constant 0 : i32
    %c0_i32_0 = arith.constant 0 : i32
    return %arg0, %c0_i32 : i32, i32
  }
  func.func @transform_13(%arg0: i32) -> (i32, i32) {
    %c0_i32 = arith.constant 0 : i32
    %c0_i32_0 = arith.constant 0 : i32
    return %arg0, %c0_i32 : i32, i32
  }
}

</mosaic_0001>

<llo_original>
// kernel: tpu_custom_call.1
$region0: #{tpu_custom_call.1}
  #allocation0 [shape = 'u32[]', space=smem, size = 0x4, offset = 0x4, fixed_abs, tag = 'smem constant byte address 0x4 - core index']
  #allocation1 [shape = 'u32[144,128]{1,0:T(1,128)}', space=vmem, size = 0x12000, scoped, tag = 'internal scratch']
  %s0 = inlined_call_operand.vmem [shape: f32[64,32], index: 0, kind: input, shape index: {}]
  %s1 = inlined_call_operand.vmem [shape: f32[64,32], index: 1, kind: input, shape index: {}]
  %s2 = inlined_call_operand.vmem [shape: f32[32,32], index: 2, kind: input, shape index: {}]
  %s3 = inlined_call_operand.vmem [shape: f32[1,32], index: 3, kind: input, shape index: {}]
  %s4 = inlined_call_operand.vmem [shape: f32[32,32], index: 4, kind: input, shape index: {}]
  %s5 = inlined_call_operand.vmem [shape: f32[1,32], index: 5, kind: input, shape index: {}]
  %s6 = inlined_call_operand.vmem [shape: f32[32,32], index: 6, kind: input, shape index: {}]
  %s7 = inlined_call_operand.vmem [shape: f32[1,32], index: 7, kind: input, shape index: {}]
  %s8 = inlined_call_operand.vmem [shape: f32[32,16], index: 8, kind: input, shape index: {}]
  %s9 = inlined_call_operand.vmem [shape: f32[1,16], index: 9, kind: input, shape index: {}]
  %s10 = inlined_call_operand.vmem [shape: f32[64,16], index: 10, kind: output, shape index: {0}]
  %s11 = inlined_call_operand.vmem [shape: f32[64,32], index: 11, kind: output, shape index: {1}]
  %s12 = inlined_call_operand.vmem [shape: f32[64,32], index: 12, kind: output, shape index: {2}]
  %s13 = inlined_call_operand.vmem [shape: f32[64,32], index: 13, kind: output, shape index: {3}]
  %14 = xla_tuple %s10, %s11, %s12, %s13
  %s15 = sld [smem:[#allocation0]]
  $region97: #{tpu_custom_call.1} parent=0
    _
  %s17 = ssub.s32 1, %s15
  %s18 = scalar_select 0, %s17, %s15
  loop: start=0, step=1, limit=6
  $region2: #{tpu_custom_call.1} parent=0 // loop_pre_header
    _
  $region3: #{tpu_custom_call.1} parent=0 // loop_header
    %s20 = sphi 0, %s24
    %p21 = scmp.ge.s32.totalorder %s20, 6
    %s30 = sphi 0, %s32
    %s33 = sphi 0, %s30
    %s34 = sphi 0, %s33
    %s50 = sphi 0, %s34
    %s56 = sphi 0, %s58
    %s59 = sphi 0, %s56
    %s60 = sphi 0, %s59
    %s76 = sphi 0, %s60
    %s80 = sphi 0, %s80
    %s82 = sphi 0, %s80
    %s83 = sphi 0, %s82
    %s97 = sphi 0, %s83
    %s101 = sphi 0, %s101
    %s103 = sphi 0, %s101
    %s104 = sphi 0, %s103
    %s118 = sphi 0, %s104
    %s122 = sphi 0, %s122
    %s124 = sphi 0, %s122
    %s125 = sphi 0, %s124
    %s139 = sphi 0, %s125
    %s143 = sphi 0, %s143
    %s145 = sphi 0, %s143
    %s146 = sphi 0, %s145
    %s160 = sphi 0, %s146
    %s164 = sphi 0, %s164
    %s166 = sphi 0, %s164
    %s167 = sphi 0, %s166
    %s181 = sphi 0, %s167
    %s185 = sphi 0, %s185
    %s187 = sphi 0, %s185
    %s188 = sphi 0, %s187
    %s202 = sphi 0, %s188
    %s206 = sphi 0, %s206
    %s208 = sphi 0, %s206
    %s209 = sphi 0, %s208
    %s223 = sphi 0, %s209
    %s227 = sphi 0, %s227
    %s229 = sphi 0, %s227
    %s230 = sphi 0, %s229
    %s244 = sphi 0, %s230
    %s250 = sphi 0, %s252
    %s253 = sphi 0, %s250
    %s254 = sphi 0, %s253
    %s270 = sphi 0, %s254
    %s276 = sphi 0, %s278
    %s279 = sphi 0, %s276
    %s280 = sphi 0, %s279
    %s296 = sphi 0, %s280
    %s302 = sphi 0, %s304
    %s305 = sphi 0, %s302
    %s306 = sphi 0, %s305
    %s322 = sphi 0, %s306
    %s328 = sphi 0, %s330
    %s331 = sphi 0, %s328
    %s332 = sphi 0, %s331
    %s348 = sphi 0, %s332
  $region4: #{tpu_custom_call.1} parent=0 // loop_header_branch
    %23 = sbr.rel (%p21) target = $region8
  $region5: #{tpu_custom_call.1} parent=0 // loop_body
    %s25 = ssub.s32 %s20, 1
    %s26 = ssub.s32 %s20, 2
    %s27 = sadd.s32 %s20, 1
    %s28 = ssub.s32 %s20, %s27
    %p29 = scmp.eq.s32.totalorder %s28, 0
    %s31 = sadd.s32 %s30, 1
    %s32 = scalar_select %p29, %s30, %s31
    %p35 = pneg %p29
    %p36 = scmp.eq.s32.totalorder %s20, 3
    %p37 = por %p35, %p36
    %p38 = scmp.ne.s32.totalorder %s30, %s33
    %p39 = scmp.eq.s32.totalorder %s20, 0
    %p40 = por %p38, %p39
    %p41 = scmp.ne.s32.totalorder %s30, %s33
    %p42 = scmp.eq.s32.totalorder %s25, 3
    %p43 = por %p41, %p42
    %p44 = scmp.ne.s32.totalorder %s33, %s34
    %p45 = scmp.eq.s32.totalorder %s25, 0
    %p46 = por %p44, %p45
    %p47 = scmp.ne.s32.totalorder %s33, %s34
    %p48 = scmp.eq.s32.totalorder %s26, 3
    %p49 = por %p47, %p48
    %p51 = scmp.ne.s32.totalorder %s34, %s50
    %p52 = scmp.eq.s32.totalorder %s26, 0
    %p53 = por %p51, %p52
    %s54 = ssub.s32 %s20, %s27
    %p55 = scmp.eq.s32.totalorder %s54, 0
    %s57 = sadd.s32 %s56, 1
    %s58 = scalar_select %p55, %s56, %s57
    %p61 = pneg %p55
    %p62 = scmp.eq.s32.totalorder %s20, 3
    %p63 = por %p61, %p62
    %p64 = scmp.ne.s32.totalorder %s56, %s59
    %p65 = scmp.eq.s32.totalorder %s20, 0
    %p66 = por %p64, %p65
    %p67 = scmp.ne.s32.totalorder %s56, %s59
    %p68 = scmp.eq.s32.totalorder %s25, 3
    %p69 = por %p67, %p68
    %p70 = scmp.ne.s32.totalorder %s59, %s60
    %p71 = scmp.eq.s32.totalorder %s25, 0
    %p72 = por %p70, %p71
    %p73 = scmp.ne.s32.totalorder %s59, %s60
    %p74 = scmp.eq.s32.totalorder %s26, 3
    %p75 = por %p73, %p74
    %p77 = scmp.ne.s32.totalorder %s60, %s76
    %p78 = scmp.eq.s32.totalorder %s26, 0
    %p79 = por %p77, %p78
    %s81 = sadd.s32 %s80, 1
    %p84 = scmp.eq.s32.totalorder %s20, 3
    %p85 = scmp.ne.s32.totalorder %s80, %s82
    %p86 = scmp.eq.s32.totalorder %s20, 0
    %p87 = por %p85, %p86
    %p88 = scmp.ne.s32.totalorder %s80, %s82
    %p89 = scmp.eq.s32.totalorder %s25, 3
    %p90 = por %p88, %p89
    %p91 = scmp.ne.s32.totalorder %s82, %s83
    %p92 = scmp.eq.s32.totalorder %s25, 0
    %p93 = por %p91, %p92
    %p94 = scmp.ne.s32.totalorder %s82, %s83
    %p95 = scmp.eq.s32.totalorder %s26, 3
    %p96 = por %p94, %p95
    %p98 = scmp.ne.s32.totalorder %s83, %s97
    %p99 = scmp.eq.s32.totalorder %s26, 0
    %p100 = por %p98, %p99
    %s102 = sadd.s32 %s101, 1
    %p105 = scmp.eq.s32.totalorder %s20, 3
    %p106 = scmp.ne.s32.totalorder %s101, %s103
    %p107 = scmp.eq.s32.totalorder %s20, 0
    %p108 = por %p106, %p107
    %p109 = scmp.ne.s32.totalorder %s101, %s103
    %p110 = scmp.eq.s32.totalorder %s25, 3
    %p111 = por %p109, %p110
    %p112 = scmp.ne.s32.totalorder %s103, %s104
    %p113 = scmp.eq.s32.totalorder %s25, 0
    %p114 = por %p112, %p113
    %p115 = scmp.ne.s32.totalorder %s103, %s104
    %p116 = scmp.eq.s32.totalorder %s26, 3
    %p117 = por %p115, %p116
    %p119 = scmp.ne.s32.totalorder %s104, %s118
    %p120 = scmp.eq.s32.totalorder %s26, 0
    %p121 = por %p119, %p120
    %s123 = sadd.s32 %s122, 1
    %p126 = scmp.eq.s32.totalorder %s20, 3
    %p127 = scmp.ne.s32.totalorder %s122, %s124
    %p128 = scmp.eq.s32.totalorder %s20, 0
    %p129 = por %p127, %p128
    %p130 = scmp.ne.s32.totalorder %s122, %s124
    %p131 = scmp.eq.s32.totalorder %s25, 3
    %p132 = por %p130, %p131
    %p133 = scmp.ne.s32.totalorder %s124, %s125
    %p134 = scmp.eq.s32.totalorder %s25, 0
    %p135 = por %p133, %p134
    %p136 = scmp.ne.s32.totalorder %s124, %s125
    %p137 = scmp.eq.s32.totalorder %s26, 3
    %p138 = por %p136, %p137
    %p140 = scmp.ne.s32.totalorder %s125, %s139
    %p141 = scmp.eq.s32.totalorder %s26, 0
    %p142 = por %p140, %p141
    %s144 = sadd.s32 %s143, 1
    %p147 = scmp.eq.s32.totalorder %s20, 3
    %p148 = scmp.ne.s32.totalorder %s143, %s145
    %p149 = scmp.eq.s32.totalorder %s20, 0
    %p150 = por %p148, %p149
    %p151 = scmp.ne.s32.totalorder %s143, %s145
    %p152 = scmp.eq.s32.totalorder %s25, 3
    %p153 = por %p151, %p152
    %p154 = scmp.ne.s32.totalorder %s145, %s146
    %p155 = scmp.eq.s32.totalorder %s25, 0
    %p156 = por %p154, %p155
    %p157 = scmp.ne.s32.totalorder %s145, %s146
    %p158 = scmp.eq.s32.totalorder %s26, 3
    %p159 = por %p157, %p158
    %p161 = scmp.ne.s32.totalorder %s146, %s160
    %p162 = scmp.eq.s32.totalorder %s26, 0
    %p163 = por %p161, %p162
    %s165 = sadd.s32 %s164, 1
    %p168 = scmp.eq.s32.totalorder %s20, 3
    %p169 = scmp.ne.s32.totalorder %s164, %s166
    %p170 = scmp.eq.s32.totalorder %s20, 0
    %p171 = por %p169, %p170
    %p172 = scmp.ne.s32.totalorder %s164, %s166
    %p173 = scmp.eq.s32.totalorder %s25, 3
    %p174 = por %p172, %p173
    %p175 = scmp.ne.s32.totalorder %s166, %s167
    %p176 = scmp.eq.s32.totalorder %s25, 0
    %p177 = por %p175, %p176
    %p178 = scmp.ne.s32.totalorder %s166, %s167
    %p179 = scmp.eq.s32.totalorder %s26, 3
    %p180 = por %p178, %p179
    %p182 = scmp.ne.s32.totalorder %s167, %s181
    %p183 = scmp.eq.s32.totalorder %s26, 0
    %p184 = por %p182, %p183
    %s186 = sadd.s32 %s185, 1
    %p189 = scmp.eq.s32.totalorder %s20, 3
    %p190 = scmp.ne.s32.totalorder %s185, %s187
    %p191 = scmp.eq.s32.totalorder %s20, 0
    %p192 = por %p190, %p191
    %p193 = scmp.ne.s32.totalorder %s185, %s187
    %p194 = scmp.eq.s32.totalorder %s25, 3
    %p195 = por %p193, %p194
    %p196 = scmp.ne.s32.totalorder %s187, %s188
    %p197 = scmp.eq.s32.totalorder %s25, 0
    %p198 = por %p196, %p197
    %p199 = scmp.ne.s32.totalorder %s187, %s188
    %p200 = scmp.eq.s32.totalorder %s26, 3
    %p201 = por %p199, %p200
    %p203 = scmp.ne.s32.totalorder %s188, %s202
    %p204 = scmp.eq.s32.totalorder %s26, 0
    %p205 = por %p203, %p204
    %s207 = sadd.s32 %s206, 1
    %p210 = scmp.eq.s32.totalorder %s20, 3
    %p211 = scmp.ne.s32.totalorder %s206, %s208
    %p212 = scmp.eq.s32.totalorder %s20, 0
    %p213 = por %p211, %p212
    %p214 = scmp.ne.s32.totalorder %s206, %s208
    %p215 = scmp.eq.s32.totalorder %s25, 3
    %p216 = por %p214, %p215
    %p217 = scmp.ne.s32.totalorder %s208, %s209
    %p218 = scmp.eq.s32.totalorder %s25, 0
    %p219 = por %p217, %p218
    %p220 = scmp.ne.s32.totalorder %s208, %s209
    %p221 = scmp.eq.s32.totalorder %s26, 3
    %p222 = por %p220, %p221
    %p224 = scmp.ne.s32.totalorder %s209, %s223
    %p225 = scmp.eq.s32.totalorder %s26, 0
    %p226 = por %p224, %p225
    %s228 = sadd.s32 %s227, 1
    %p231 = scmp.eq.s32.totalorder %s20, 3
    %p232 = scmp.ne.s32.totalorder %s227, %s229
    %p233 = scmp.eq.s32.totalorder %s20, 0
    %p234 = por %p232, %p233
    %p235 = scmp.ne.s32.totalorder %s227, %s229
    %p236 = scmp.eq.s32.totalorder %s25, 3
    %p237 = por %p235, %p236
    %p238 = scmp.ne.s32.totalorder %s229, %s230
    %p239 = scmp.eq.s32.totalorder %s25, 0
    %p240 = por %p238, %p239
    %p241 = scmp.ne.s32.totalorder %s229, %s230
    %p242 = scmp.eq.s32.totalorder %s26, 3
    %p243 = por %p241, %p242
    %p245 = scmp.ne.s32.totalorder %s230, %s244
    %p246 = scmp.eq.s32.totalorder %s26, 0
    %p247 = por %p245, %p246
    %s248 = ssub.s32 %s20, %s27
    %p249 = scmp.eq.s32.totalorder %s248, 0
    %s251 = sadd.s32 %s250, 1
    %s252 = scalar_select %p249, %s250, %s251
    %p255 = pneg %p249
    %p256 = scmp.eq.s32.totalorder %s20, 3
    %p257 = por %p255, %p256
    %p258 = scmp.ne.s32.totalorder %s250, %s253
    %p259 = scmp.eq.s32.totalorder %s20, 0
    %p260 = por %p258, %p259
    %p261 = scmp.ne.s32.totalorder %s250, %s253
    %p262 = scmp.eq.s32.totalorder %s25, 3
    %p263 = por %p261, %p262
    %p264 = scmp.ne.s32.totalorder %s253, %s254
    %p265 = scmp.eq.s32.totalorder %s25, 0
    %p266 = por %p264, %p265
    %p267 = scmp.ne.s32.totalorder %s253, %s254
    %p268 = scmp.eq.s32.totalorder %s26, 3
    %p269 = por %p267, %p268
    %p271 = scmp.ne.s32.totalorder %s254, %s270
    %p272 = scmp.eq.s32.totalorder %s26, 0
    %p273 = por %p271, %p272
    %s274 = ssub.s32 %s20, %s27
    %p275 = scmp.eq.s32.totalorder %s274, 0
    %s277 = sadd.s32 %s276, 1
    %s278 = scalar_select %p275, %s276, %s277
    %p281 = pneg %p275
    %p282 = scmp.eq.s32.totalorder %s20, 3
    %p283 = por %p281, %p282
    %p284 = scmp.ne.s32.totalorder %s276, %s279
    %p285 = scmp.eq.s32.totalorder %s20, 0
    %p286 = por %p284, %p285
    %p287 = scmp.ne.s32.totalorder %s276, %s279
    %p288 = scmp.eq.s32.totalorder %s25, 3
    %p289 = por %p287, %p288
    %p290 = scmp.ne.s32.totalorder %s279, %s280
    %p291 = scmp.eq.s32.totalorder %s25, 0
    %p292 = por %p290, %p291
    %p293 = scmp.ne.s32.totalorder %s279, %s280
    %p294 = scmp.eq.s32.totalorder %s26, 3
    %p295 = por %p293, %p294
    %p297 = scmp.ne.s32.totalorder %s280, %s296
    %p298 = scmp.eq.s32.totalorder %s26, 0
    %p299 = por %p297, %p298
    %s300 = ssub.s32 %s20, %s27
    %p301 = scmp.eq.s32.totalorder %s300, 0
    %s303 = sadd.s32 %s302, 1
    %s304 = scalar_select %p301, %s302, %s303
    %p307 = pneg %p301
    %p308 = scmp.eq.s32.totalorder %s20, 3
    %p309 = por %p307, %p308
    %p310 = scmp.ne.s32.totalorder %s302, %s305
    %p311 = scmp.eq.s32.totalorder %s20, 0
    %p312 = por %p310, %p311
    %p313 = scmp.ne.s32.totalorder %s302, %s305
    %p314 = scmp.eq.s32.totalorder %s25, 3
    %p315 = por %p313, %p314
    %p316 = scmp.ne.s32.totalorder %s305, %s306
    %p317 = scmp.eq.s32.totalorder %s25, 0
    %p318 = por %p316, %p317
    %p319 = scmp.ne.s32.totalorder %s305, %s306
    %p320 = scmp.eq.s32.totalorder %s26, 3
    %p321 = por %p319, %p320
    %p323 = scmp.ne.s32.totalorder %s306, %s322
    %p324 = scmp.eq.s32.totalorder %s26, 0
    %p325 = por %p323, %p324
    %s326 = ssub.s32 %s20, %s27
    %p327 = scmp.eq.s32.totalorder %s326, 0
    %s329 = sadd.s32 %s328, 1
    %s330 = scalar_select %p327, %s328, %s329
    %p333 = pneg %p327
    %p334 = scmp.eq.s32.totalorder %s20, 3
    %p335 = por %p333, %p334
    %p336 = scmp.ne.s32.totalorder %s328, %s331
    %p337 = scmp.eq.s32.totalorder %s20, 0
    %p338 = por %p336, %p337
    %p339 = scmp.ne.s32.totalorder %s328, %s331
    %p340 = scmp.eq.s32.totalorder %s25, 3
    %p341 = por %p339, %p340
    %p342 = scmp.ne.s32.totalorder %s331, %s332
    %p343 = scmp.eq.s32.totalorder %s25, 0
    %p344 = por %p342, %p343
    %p345 = scmp.ne.s32.totalorder %s331, %s332
    %p346 = scmp.eq.s32.totalorder %s26, 3
    %p347 = por %p345, %p346
    %p349 = scmp.ne.s32.totalorder %s332, %s348
    %p350 = scmp.eq.s32.totalorder %s26, 0
    %p351 = por %p349, %p350
    %p352 = scmp.le.s32.totalorder 1, %s20
    %p353 = scmp.lt.s32.totalorder %s20, 5
    %p354 = pnand %p352, %p353
    %p355 = pneg %p354
    // Predicated region
    $region9: #{tpu_custom_call.1} parent=5 // pred_check
      _
    $region10: #{tpu_custom_call.1} parent=5 // pred_check_branch
      %357 = sbr.rel (%p354) target = $region12
    $region11: #{tpu_custom_call.1} parent=5 // pred_region
      %s358 = ssub.s32 %s20, 1
      // Predicated region
      $region13: #{tpu_custom_call.1} parent=11 // pred_check
        %p359 = pneg %p93
      $region14: #{tpu_custom_call.1} parent=11 // pred_check_branch
        %361 = sbr.rel (%p359) target = $region16
      $region15: #{tpu_custom_call.1} parent=11 // pred_region
        _
      $region16: #{tpu_custom_call.1} parent=11 // pred_fallthru
        _
      // Predicated region
      $region17: #{tpu_custom_call.1} parent=11 // pred_check
        %p362 = pneg %p114
      $region18: #{tpu_custom_call.1} parent=11 // pred_check_branch
        %364 = sbr.rel (%p362) target = $region20
      $region19: #{tpu_custom_call.1} parent=11 // pred_region
        _
      $region20: #{tpu_custom_call.1} parent=11 // pred_fallthru
        _
      // Predicated region
      $region21: #{tpu_custom_call.1} parent=11 // pred_check
        %p365 = pneg %p135
      $region22: #{tpu_custom_call.1} parent=11 // pred_check_branch
        %367 = sbr.rel (%p365) target = $region24
      $region23: #{tpu_custom_call.1} parent=11 // pred_region
        _
      $region24: #{tpu_custom_call.1} parent=11 // pred_fallthru
        _
      // Predicated region
      $region25: #{tpu_custom_call.1} parent=11 // pred_check
        %p368 = pneg %p156
      $region26: #{tpu_custom_call.1} parent=11 // pred_check_branch
        %370 = sbr.rel (%p368) target = $region28
      $region27: #{tpu_custom_call.1} parent=11 // pred_region
        _
      $region28: #{tpu_custom_call.1} parent=11 // pred_fallthru
        _
      // Predicated region
      $region29: #{tpu_custom_call.1} parent=11 // pred_check
        %p371 = pneg %p177
      $region30: #{tpu_custom_call.1} parent=11 // pred_check_branch
        %373 = sbr.rel (%p371) target = $region32
      $region31: #{tpu_custom_call.1} parent=11 // pred_region
        _
      $region32: #{tpu_custom_call.1} parent=11 // pred_fallthru
        _
      // Predicated region
      $region33: #{tpu_custom_call.1} parent=11 // pred_check
        %p374 = pneg %p198
      $region34: #{tpu_custom_call.1} parent=11 // pred_check_branch
        %376 = sbr.rel (%p374) target = $region36
      $region35: #{tpu_custom_call.1} parent=11 // pred_region
        _
      $region36: #{tpu_custom_call.1} parent=11 // pred_fallthru
        _
      // Predicated region
      $region37: #{tpu_custom_call.1} parent=11 // pred_check
        %p377 = pneg %p219
      $region38: #{tpu_custom_call.1} parent=11 // pred_check_branch
        %379 = sbr.rel (%p377) target = $region40
      $region39: #{tpu_custom_call.1} parent=11 // pred_region
        _
      $region40: #{tpu_custom_call.1} parent=11 // pred_fallthru
        _
      // Predicated region
      $region41: #{tpu_custom_call.1} parent=11 // pred_check
        %p380 = pneg %p240
      $region42: #{tpu_custom_call.1} parent=11 // pred_check_branch
        %382 = sbr.rel (%p380) target = $region44
      $region43: #{tpu_custom_call.1} parent=11 // pred_region
        _
      $region44: #{tpu_custom_call.1} parent=11 // pred_fallthru
        _
    $region12: #{tpu_custom_call.1} parent=5 // pred_fallthru
      _
    %p383 = scmp.lt.s32.totalorder %s20, 4
    // Predicated region
    $region45: #{tpu_custom_call.1} parent=5 // pred_check
      %p384 = pneg %p383
    $region46: #{tpu_custom_call.1} parent=5 // pred_check_branch
      %386 = sbr.rel (%p384) target = $region48
    $region47: #{tpu_custom_call.1} parent=5 // pred_region
      // Predicated region
      $region49: #{tpu_custom_call.1} parent=47 // pred_check
        %p387 = pneg %p40
      $region50: #{tpu_custom_call.1} parent=47 // pred_check_branch
        %389 = sbr.rel (%p387) target = $region52
      $region51: #{tpu_custom_call.1} parent=47 // pred_region
        %s390 = smul.u32 2, %s20
        %p391 = scmp.lt.s32.totalorder %s390, 7
        %s392 = scalar_select %p391, %s390, 7
        %s393 = smul.addr %s392, 8
        %s394 = scalar_lea.vmem %s0, %s393
        %s395 = smul.u32 2, %s20
      $region52: #{tpu_custom_call.1} parent=47 // pred_fallthru
        _
      // Predicated region
      $region53: #{tpu_custom_call.1} parent=47 // pred_check
        %p396 = pneg %p66
      $region54: #{tpu_custom_call.1} parent=47 // pred_check_branch
        %398 = sbr.rel (%p396) target = $region56
      $region55: #{tpu_custom_call.1} parent=47 // pred_region
        %s399 = smul.u32 2, %s20
        %p400 = scmp.lt.s32.totalorder %s399, 7
        %s401 = scalar_select %p400, %s399, 7
        %s402 = smul.addr %s401, 8
        %s403 = scalar_lea.vmem %s1, %s402
        %s404 = smul.u32 2, %s20
      $region56: #{tpu_custom_call.1} parent=47 // pred_fallthru
        _
    $region48: #{tpu_custom_call.1} parent=5 // pred_fallthru
      _
    %p405 = scmp.le.s32.totalorder 1, %s20
    %p406 = scmp.lt.s32.totalorder %s20, 5
    %p407 = pnand %p405, %p406
    %p408 = pneg %p407
    // Predicated region
    $region57: #{tpu_custom_call.1} parent=5 // pred_check
      _
    $region58: #{tpu_custom_call.1} parent=5 // pred_check_branch
      %410 = sbr.rel (%p407) target = $region60
    $region59: #{tpu_custom_call.1} parent=5 // pred_region
      %s411 = ssub.s32 %s20, 1
      %s412 = smul.u32 2, %s25
      %p413 = scmp.lt.s32.totalorder %s412, 7
      %s414 = scalar_select %p413, %s412, 7
      %s415 = smul.addr %s414, 8
      %s416 = scalar_lea.vmem %s0, %s415
      %p417 = pneg %p46
      %p418 = pneg %p43
      %s419 = smul.u32 2, %s25
      %p420 = scmp.lt.s32.totalorder %s419, 7
      %s421 = scalar_select %p420, %s419, 7
      %s422 = smul.addr %s421, 8
      %s423 = scalar_lea.vmem %s1, %s422
      %p424 = pneg %p72
      %p425 = pneg %p69
      %p426 = pneg %p93
      %p427 = pneg %p90
      %p428 = pneg %p114
      %p429 = pneg %p111
      %p430 = pneg %p135
      %p431 = pneg %p132
      %p432 = pneg %p156
      %p433 = pneg %p153
      %p434 = pneg %p177
      %p435 = pneg %p174
      %p436 = pneg %p198
      %p437 = pneg %p195
      %p438 = pneg %p219
      %p439 = pneg %p216
      %p440 = pneg %p240
      %p441 = pneg %p237
      %p442 = pneg %p266
      %p443 = pneg %p263
      %s444 = smul.u32 2, %s25
      %p445 = scmp.lt.s32.totalorder %s444, 7
      %s446 = scalar_select %p445, %s444, 7
      %s447 = smul.addr %s446, 8
      %s448 = scalar_lea.vmem %s10, %s447
      %p449 = pneg %p292
      %p450 = pneg %p289
      %s451 = smul.u32 2, %s25
      %p452 = scmp.lt.s32.totalorder %s451, 7
      %s453 = scalar_select %p452, %s451, 7
      %s454 = smul.addr %s453, 8
      %s455 = scalar_lea.vmem %s11, %s454
      %p456 = pneg %p318
      %p457 = pneg %p315
      %s458 = smul.u32 2, %s25
      %p459 = scmp.lt.s32.totalorder %s458, 7
      %s460 = scalar_select %p459, %s458, 7
      %s461 = smul.addr %s460, 8
      %s462 = scalar_lea.vmem %s12, %s461
      %p463 = pneg %p344
      %p464 = pneg %p341
      %s465 = smul.u32 2, %s25
      %p466 = scmp.lt.s32.totalorder %s465, 7
      %s467 = scalar_select %p466, %s465, 7
      %s468 = smul.addr %s467, 8
      %s469 = scalar_lea.vmem %s13, %s468
      %s470 = smul.u32 2, %s25
      %p471 = scmp.lt.s32.totalorder %s470, 7
      %s472 = scalar_select %p471, %s470, 7
      %s473 = smul.addr %s472, 8
      %s474 = scalar_lea.vmem %s0, %s473
      %s475 = smul.u32 2, %s25
      %s476 = smul.u32 2, %s25
      %p477 = scmp.lt.s32.totalorder %s476, 7
      %s478 = scalar_select %p477, %s476, 7
      %s479 = smul.addr %s478, 8
      %s480 = scalar_lea.vmem %s1, %s479
      %s481 = smul.u32 2, %s25
      %s482 = smul.u32 2, %s25
      %p483 = scmp.lt.s32.totalorder %s482, 7
      %s484 = scalar_select %p483, %s482, 7
      %s485 = smul.addr %s484, 8
      %s486 = scalar_lea.vmem %s10, %s485
      %s487 = smul.u32 2, %s25
      %s488 = smul.u32 2, %s25
      %p489 = scmp.lt.s32.totalorder %s488, 7
      %s490 = scalar_select %p489, %s488, 7
      %s491 = smul.addr %s490, 8
      %s492 = scalar_lea.vmem %s11, %s491
      %s493 = smul.u32 2, %s25
      %s494 = smul.u32 2, %s25
      %p495 = scmp.lt.s32.totalorder %s494, 7
      %s496 = scalar_select %p495, %s494, 7
      %s497 = smul.addr %s496, 8
      %s498 = scalar_lea.vmem %s12, %s497
      %s499 = smul.u32 2, %s25
      %s500 = smul.u32 2, %s25
      %p501 = scmp.lt.s32.totalorder %s500, 7
      %s502 = scalar_select %p501, %s500, 7
      %s503 = smul.addr %s502, 8
      %s504 = scalar_lea.vmem %s13, %s503
      %s505 = smul.u32 2, %s25
      %v506 = vld [vmem:[%s474] sm:$0xff]
      %v507 = vld [vmem:[%s474 + $0x8] sm:$0xff]
      %vm508 = vcmp.ne.f32.partialorder %v506, %v506
      %vm509 = vcmp.ne.f32.partialorder %v507, %v507
      %v510 = vld [vmem:[%s480] sm:$0xff]
      %v511 = vld [vmem:[%s480 + $0x8] sm:$0xff]
      %v512 = vsel %vm508, %v510, %v506
      %v513 = vsel %vm509, %v511, %v507
      %vm514 = vcmask 261120
      %515 = vst.msk [vmem:[%s492] sm:$0xff] %vm514, %v512
      %516 = vst.msk [vmem:[%s492 + $0x8] sm:$0xff] %vm514, %v513
      %v517 = vld [vmem:[%s2] sm:$0xff]
      %v518 = vld [vmem:[%s2 + $0x8] sm:$0xff]
      %v519 = vld [vmem:[%s2 + $0x10] sm:$0xff]
      %v520 = vld [vmem:[%s2 + $0x18] sm:$0xff]
      %v521 = vld [vmem:[%s3] sm:$0x1]
      %v523 = vlaneseq
      %v524 = vshrl.u32 %v523, 7
      %v525 = vsub.s32 0, %v524
      %v526 = vrot.slane %v521, %v525
      %v529 = vsel %vm514, %v512, 0
      %v532 = vsel %vm514, %v513, 0
      %534 = vmatprep.subr.mxu0 0.0
      %535 = vmatpush1.msra.mxu0 0.0
      %536 = vmatprep.subr.mxu0 0.0
      %537 = vmatpush1.msra.mxu0 0.0
      %538 = vmatprep.subr.mxu0 0.0
      %539 = vmatpush1.msra.mxu0 0.0
      %540 = vmatprep.subr.mxu0 0.0
      %541 = vmatpush1.msra.mxu0 0.0
      %542 = vmatprep.subr.mxu0 0.0
      %543 = vmatpush1.msra.mxu0 0.0
      %544 = vmatprep.subr.mxu0 0.0
      %545 = vmatpush1.msra.mxu0 0.0
      %546 = vmatprep.subr.mxu0 0.0
      %547 = vmatpush1.msra.mxu0 0.0
      %548 = vmatprep.subr.mxu0 0.0
      %549 = vmatpush1.msra.mxu0 0.0
      %550 = vmatprep.subr.mxu0 0.0
      %551 = vmatpush1.msra.mxu0 0.0
      %552 = vmatprep.subr.mxu0 0.0
      %553 = vmatpush1.msra.mxu0 0.0
      %554 = vmatprep.subr.mxu0 0.0
      %555 = vmatpush1.msra.mxu0 0.0
      %556 = vmatprep.subr.mxu0 0.0
      %557 = vmatpush1.msra.mxu0 0.0
      %558 = vmatprep.subr.mxu0 0.0
      %559 = vmatpush1.msra.mxu0 %v520
      %560 = vmatprep.subr.mxu0 0.0
      %561 = vmatpush1.msra.mxu0 %v519
      %562 = vmatprep.subr.mxu0 0.0
      %563 = vmatpush1.msra.mxu0 %v518
      %564 = vmatprep.subr.mxu0 0.0
      %565 = vmatpush1.msra.mxu0 %v517
      %566 = vmatprep.subr.mxu0 0.0
      %567 = vmatpush2.msra.mxu0 0.0
      %568 = vmatprep.subr.mxu0 0.0
      %569 = vmatpush2.msra.mxu0 0.0
      %570 = vmatprep.subr.mxu0 0.0
      %571 = vmatpush2.msra.mxu0 0.0
      %572 = vmatprep.subr.mxu0 0.0
      %573 = vmatpush2.msra.mxu0 0.0
      %574 = vmatprep.subr.mxu0 0.0
      %575 = vmatpush2.msra.mxu0 0.0
      %576 = vmatprep.subr.mxu0 0.0
      %577 = vmatpush2.msra.mxu0 0.0
      %578 = vmatprep.subr.mxu0 0.0
      %579 = vmatpush2.msra.mxu0 0.0
      %580 = vmatprep.subr.mxu0 0.0
      %581 = vmatpush2.msra.mxu0 0.0
      %582 = vmatprep.subr.mxu0 0.0
      %583 = vmatpush2.msra.mxu0 0.0
      %584 = vmatprep.subr.mxu0 0.0
      %585 = vmatpush2.msra.mxu0 0.0
      %586 = vmatprep.subr.mxu0 0.0
      %587 = vmatpush2.msra.mxu0 0.0
      %588 = vmatprep.subr.mxu0 0.0
      %589 = vmatpush2.msra.mxu0 0.0
      %590 = vmatprep.subr.mxu0 0.0
      %591 = vmatpush2.msra.mxu0 0.0
      %592 = vmatprep.subr.mxu0 0.0
      %593 = vmatpush2.msra.mxu0 0.0
      %594 = vmatprep.subr.mxu0 0.0
      %595 = vmatpush2.msra.mxu0 0.0
      %596 = vmatprep.subr.mxu0 0.0
      %597 = vmatpush2.msra.mxu0 0.0
      %598 = vmatprep.mubr.f32.mxu0 0.0
      %599 = vmatmul.mubr.f32.gmra.mxu0 %v529
      %v600 = vpop.f32.mrf.mxu0
      %v601 = vadd.f32 %v526, %v600
      %v602 = vpop.f32.mrf.mxu0
      %603 = vmatprep.mubr.f32.mxu0 0.0
      %604 = vmatmul.mubr.f32.gmra.mxu0 %v532
      %v605 = vpop.f32.mrf.mxu0
      %v606 = vadd.f32 %v526, %v605
      %v607 = vpop.f32.mrf.mxu0
      %608 = vdwg.mxu0
      %609 = vst.msk [vmem:[%s498] sm:$0xff] %vm514, %v601
      %610 = vst.msk [vmem:[%s498 + $0x8] sm:$0xff] %vm514, %v606
      %v611 = vmax.f32 %v601, 0.0
      %v612 = vmax.f32 %v606, 0.0
      %v613 = vld [vmem:[%s4] sm:$0xff]
      %v614 = vld [vmem:[%s4 + $0x8] sm:$0xff]
      %v615 = vld [vmem:[%s4 + $0x10] sm:$0xff]
      %v616 = vld [vmem:[%s4 + $0x18] sm:$0xff]
      %v617 = vld [vmem:[%s5] sm:$0x1]
      %v619 = vlaneseq
      %v620 = vshrl.u32 %v619, 7
      %v621 = vsub.s32 0, %v620
      %v622 = vrot.slane %v617, %v621
      %v625 = vsel %vm514, %v611, 0
      %v628 = vsel %vm514, %v612, 0
      %630 = vmatprep.subr.mxu0 0.0
      %631 = vmatpush1.msra.mxu0 0.0
      %632 = vmatprep.subr.mxu0 0.0
      %633 = vmatpush1.msra.mxu0 0.0
      %634 = vmatprep.subr.mxu0 0.0
      %635 = vmatpush1.msra.mxu0 0.0
      %636 = vmatprep.subr.mxu0 0.0
      %637 = vmatpush1.msra.mxu0 0.0
      %638 = vmatprep.subr.mxu0 0.0
      %639 = vmatpush1.msra.mxu0 0.0
      %640 = vmatprep.subr.mxu0 0.0
      %641 = vmatpush1.msra.mxu0 0.0
      %642 = vmatprep.subr.mxu0 0.0
      %643 = vmatpush1.msra.mxu0 0.0
      %644 = vmatprep.subr.mxu0 0.0
      %645 = vmatpush1.msra.mxu0 0.0
      %646 = vmatprep.subr.mxu0 0.0
      %647 = vmatpush1.msra.mxu0 0.0
      %648 = vmatprep.subr.mxu0 0.0
      %649 = vmatpush1.msra.mxu0 0.0
      %650 = vmatprep.subr.mxu0 0.0
      %651 = vmatpush1.msra.mxu0 0.0
      %652 = vmatprep.subr.mxu0 0.0
      %653 = vmatpush1.msra.mxu0 0.0
      %654 = vmatprep.subr.mxu0 0.0
      %655 = vmatpush1.msra.mxu0 %v616
      %656 = vmatprep.subr.mxu0 0.0
      %657 = vmatpush1.msra.mxu0 %v615
      %658 = vmatprep.subr.mxu0 0.0
      %659 = vmatpush1.msra.mxu0 %v614
      %660 = vmatprep.subr.mxu0 0.0
      %661 = vmatpush1.msra.mxu0 %v613
      %662 = vmatprep.subr.mxu0 0.0
      %663 = vmatpush2.msra.mxu0 0.0
      %664 = vmatprep.subr.mxu0 0.0
      %665 = vmatpush2.msra.mxu0 0.0
      %666 = vmatprep.subr.mxu0 0.0
      %667 = vmatpush2.msra.mxu0 0.0
      %668 = vmatprep.subr.mxu0 0.0
      %669 = vmatpush2.msra.mxu0 0.0
      %670 = vmatprep.subr.mxu0 0.0
      %671 = vmatpush2.msra.mxu0 0.0
      %672 = vmatprep.subr.mxu0 0.0
      %673 = vmatpush2.msra.mxu0 0.0
      %674 = vmatprep.subr.mxu0 0.0
      %675 = vmatpush2.msra.mxu0 0.0
      %676 = vmatprep.subr.mxu0 0.0
      %677 = vmatpush2.msra.mxu0 0.0
      %678 = vmatprep.subr.mxu0 0.0
      %679 = vmatpush2.msra.mxu0 0.0
      %680 = vmatprep.subr.mxu0 0.0
      %681 = vmatpush2.msra.mxu0 0.0
      %682 = vmatprep.subr.mxu0 0.0
      %683 = vmatpush2.msra.mxu0 0.0
      %684 = vmatprep.subr.mxu0 0.0
      %685 = vmatpush2.msra.mxu0 0.0
      %686 = vmatprep.subr.mxu0 0.0
      %687 = vmatpush2.msra.mxu0 0.0
      %688 = vmatprep.subr.mxu0 0.0
      %689 = vmatpush2.msra.mxu0 0.0
      %690 = vmatprep.subr.mxu0 0.0
      %691 = vmatpush2.msra.mxu0 0.0
      %692 = vmatprep.subr.mxu0 0.0
      %693 = vmatpush2.msra.mxu0 0.0
      %694 = vmatprep.mubr.f32.mxu0 0.0
      %695 = vmatmul.mubr.f32.gmra.mxu0 %v625
      %v696 = vpop.f32.mrf.mxu0
      %v697 = vadd.f32 %v622, %v696
      %v698 = vpop.f32.mrf.mxu0
      %699 = vmatprep.mubr.f32.mxu0 0.0
      %700 = vmatmul.mubr.f32.gmra.mxu0 %v628
      %v701 = vpop.f32.mrf.mxu0
      %v702 = vadd.f32 %v622, %v701
      %v703 = vpop.f32.mrf.mxu0
      %704 = vdwg.mxu0
      %v705 = vmax.f32 %v697, 0.0
      %v706 = vmax.f32 %v702, 0.0
      %v707 = vld [vmem:[%s6] sm:$0xff]
      %v708 = vld [vmem:[%s6 + $0x8] sm:$0xff]
      %v709 = vld [vmem:[%s6 + $0x10] sm:$0xff]
      %v710 = vld [vmem:[%s6 + $0x18] sm:$0xff]
      %v711 = vld [vmem:[%s7] sm:$0x1]
      %v713 = vlaneseq
      %v714 = vshrl.u32 %v713, 7
      %v715 = vsub.s32 0, %v714
      %v716 = vrot.slane %v711, %v715
      %v719 = vsel %vm514, %v705, 0
      %v722 = vsel %vm514, %v706, 0
      %724 = vmatprep.subr.mxu0 0.0
      %725 = vmatpush1.msra.mxu0 0.0
      %726 = vmatprep.subr.mxu0 0.0
      %727 = vmatpush1.msra.mxu0 0.0
      %728 = vmatprep.subr.mxu0 0.0
      %729 = vmatpush1.msra.mxu0 0.0
      %730 = vmatprep.subr.mxu0 0.0
      %731 = vmatpush1.msra.mxu0 0.0
      %732 = vmatprep.subr.mxu0 0.0
      %733 = vmatpush1.msra.mxu0 0.0
      %734 = vmatprep.subr.mxu0 0.0
      %735 = vmatpush1.msra.mxu0 0.0
      %736 = vmatprep.subr.mxu0 0.0
      %737 = vmatpush1.msra.mxu0 0.0
      %738 = vmatprep.subr.mxu0 0.0
      %739 = vmatpush1.msra.mxu0 0.0
      %740 = vmatprep.subr.mxu0 0.0
      %741 = vmatpush1.msra.mxu0 0.0
      %742 = vmatprep.subr.mxu0 0.0
      %743 = vmatpush1.msra.mxu0 0.0
      %744 = vmatprep.subr.mxu0 0.0
      %745 = vmatpush1.msra.mxu0 0.0
      %746 = vmatprep.subr.mxu0 0.0
      %747 = vmatpush1.msra.mxu0 0.0
      %748 = vmatprep.subr.mxu0 0.0
      %749 = vmatpush1.msra.mxu0 %v710
      %750 = vmatprep.subr.mxu0 0.0
      %751 = vmatpush1.msra.mxu0 %v709
      %752 = vmatprep.subr.mxu0 0.0
      %753 = vmatpush1.msra.mxu0 %v708
      %754 = vmatprep.subr.mxu0 0.0
      %755 = vmatpush1.msra.mxu0 %v707
      %756 = vmatprep.subr.mxu0 0.0
      %757 = vmatpush2.msra.mxu0 0.0
      %758 = vmatprep.subr.mxu0 0.0
      %759 = vmatpush2.msra.mxu0 0.0
      %760 = vmatprep.subr.mxu0 0.0
      %761 = vmatpush2.msra.mxu0 0.0
      %762 = vmatprep.subr.mxu0 0.0
      %763 = vmatpush2.msra.mxu0 0.0
      %764 = vmatprep.subr.mxu0 0.0
      %765 = vmatpush2.msra.mxu0 0.0
      %766 = vmatprep.subr.mxu0 0.0
      %767 = vmatpush2.msra.mxu0 0.0
      %768 = vmatprep.subr.mxu0 0.0
      %769 = vmatpush2.msra.mxu0 0.0
      %770 = vmatprep.subr.mxu0 0.0
      %771 = vmatpush2.msra.mxu0 0.0
      %772 = vmatprep.subr.mxu0 0.0
      %773 = vmatpush2.msra.mxu0 0.0
      %774 = vmatprep.subr.mxu0 0.0
      %775 = vmatpush2.msra.mxu0 0.0
      %776 = vmatprep.subr.mxu0 0.0
      %777 = vmatpush2.msra.mxu0 0.0
      %778 = vmatprep.subr.mxu0 0.0
      %779 = vmatpush2.msra.mxu0 0.0
      %780 = vmatprep.subr.mxu0 0.0
      %781 = vmatpush2.msra.mxu0 0.0
      %782 = vmatprep.subr.mxu0 0.0
      %783 = vmatpush2.msra.mxu0 0.0
      %784 = vmatprep.subr.mxu0 0.0
      %785 = vmatpush2.msra.mxu0 0.0
      %786 = vmatprep.subr.mxu0 0.0
      %787 = vmatpush2.msra.mxu0 0.0
      %788 = vmatprep.mubr.f32.mxu0 0.0
      %789 = vmatmul.mubr.f32.gmra.mxu0 %v719
      %v790 = vpop.f32.mrf.mxu0
      %v791 = vadd.f32 %v716, %v790
      %v792 = vpop.f32.mrf.mxu0
      %793 = vmatprep.mubr.f32.mxu0 0.0
      %794 = vmatmul.mubr.f32.gmra.mxu0 %v722
      %v795 = vpop.f32.mrf.mxu0
      %v796 = vadd.f32 %v716, %v795
      %v797 = vpop.f32.mrf.mxu0
      %798 = vdwg.mxu0
      %799 = vst.msk [vmem:[%s504] sm:$0xff] %vm514, %v791
      %800 = vst.msk [vmem:[%s504 + $0x8] sm:$0xff] %vm514, %v796
      %v801 = vmax.f32 %v791, 0.0
      %v802 = vmax.f32 %v796, 0.0
      %v803 = vld [vmem:[%s8] sm:$0xff]
      %v804 = vld [vmem:[%s8 + $0x8] sm:$0xff]
      %v805 = vld [vmem:[%s8 + $0x10] sm:$0xff]
      %v806 = vld [vmem:[%s8 + $0x18] sm:$0xff]
      %v807 = vld [vmem:[%s9] sm:$0x1]
      %v809 = vlaneseq
      %v810 = vshrl.u32 %v809, 7
      %v811 = vsub.s32 0, %v810
      %v812 = vrot.slane %v807, %v811
      %v815 = vsel %vm514, %v801, 0
      %v818 = vsel %vm514, %v802, 0
      %820 = vmatprep.subr.mxu0 0.0
      %821 = vmatpush1.msra.mxu0 0.0
      %822 = vmatprep.subr.mxu0 0.0
      %823 = vmatpush1.msra.mxu0 0.0
      %824 = vmatprep.subr.mxu0 0.0
      %825 = vmatpush1.msra.mxu0 0.0
      %826 = vmatprep.subr.mxu0 0.0
      %827 = vmatpush1.msra.mxu0 0.0
      %828 = vmatprep.subr.mxu0 0.0
      %829 = vmatpush1.msra.mxu0 0.0
      %830 = vmatprep.subr.mxu0 0.0
      %831 = vmatpush1.msra.mxu0 0.0
      %832 = vmatprep.subr.mxu0 0.0
      %833 = vmatpush1.msra.mxu0 0.0
      %834 = vmatprep.subr.mxu0 0.0
      %835 = vmatpush1.msra.mxu0 0.0
      %836 = vmatprep.subr.mxu0 0.0
      %837 = vmatpush1.msra.mxu0 0.0
      %838 = vmatprep.subr.mxu0 0.0
      %839 = vmatpush1.msra.mxu0 0.0
      %840 = vmatprep.subr.mxu0 0.0
      %841 = vmatpush1.msra.mxu0 0.0
      %842 = vmatprep.subr.mxu0 0.0
      %843 = vmatpush1.msra.mxu0 0.0
      %844 = vmatprep.subr.mxu0 0.0
      %845 = vmatpush1.msra.mxu0 %v806
      %846 = vmatprep.subr.mxu0 0.0
      %847 = vmatpush1.msra.mxu0 %v805
      %848 = vmatprep.subr.mxu0 0.0
      %849 = vmatpush1.msra.mxu0 %v804
      %850 = vmatprep.subr.mxu0 0.0
      %851 = vmatpush1.msra.mxu0 %v803
      %852 = vmatprep.subr.mxu0 0.0
      %853 = vmatpush2.msra.mxu0 0.0
      %854 = vmatprep.subr.mxu0 0.0
      %855 = vmatpush2.msra.mxu0 0.0
      %856 = vmatprep.subr.mxu0 0.0
      %857 = vmatpush2.msra.mxu0 0.0
      %858 = vmatprep.subr.mxu0 0.0
      %859 = vmatpush2.msra.mxu0 0.0
      %860 = vmatprep.subr.mxu0 0.0
      %861 = vmatpush2.msra.mxu0 0.0
      %862 = vmatprep.subr.mxu0 0.0
      %863 = vmatpush2.msra.mxu0 0.0
      %864 = vmatprep.subr.mxu0 0.0
      %865 = vmatpush2.msra.mxu0 0.0
      %866 = vmatprep.subr.mxu0 0.0
      %867 = vmatpush2.msra.mxu0 0.0
      %868 = vmatprep.subr.mxu0 0.0
      %869 = vmatpush2.msra.mxu0 0.0
      %870 = vmatprep.subr.mxu0 0.0
      %871 = vmatpush2.msra.mxu0 0.0
      %872 = vmatprep.subr.mxu0 0.0
      %873 = vmatpush2.msra.mxu0 0.0
      %874 = vmatprep.subr.mxu0 0.0
      %875 = vmatpush2.msra.mxu0 0.0
      %876 = vmatprep.subr.mxu0 0.0
      %877 = vmatpush2.msra.mxu0 0.0
      %878 = vmatprep.subr.mxu0 0.0
      %879 = vmatpush2.msra.mxu0 0.0
      %880 = vmatprep.subr.mxu0 0.0
      %881 = vmatpush2.msra.mxu0 0.0
      %882 = vmatprep.subr.mxu0 0.0
      %883 = vmatpush2.msra.mxu0 0.0
      %884 = vmatprep.mubr.f32.mxu0 0.0
      %885 = vmatmul.mubr.f32.gmra.mxu0 %v815
      %v886 = vpop.f32.mrf.mxu0
      %v887 = vadd.f32 %v812, %v886
      %v888 = vpop.f32.mrf.mxu0
      %889 = vmatprep.mubr.f32.mxu0 0.0
      %890 = vmatmul.mubr.f32.gmra.mxu0 %v818
      %v891 = vpop.f32.mrf.mxu0
      %v892 = vadd.f32 %v812, %v891
      %v893 = vpop.f32.mrf.mxu0
      %894 = vdwg.mxu0
      %vm895 = vcmask 130048
      %896 = vst.msk [vmem:[%s486] sm:$0xff] %vm895, %v887
      %897 = vst.msk [vmem:[%s486 + $0x8] sm:$0xff] %vm895, %v892
      %s898 = smul.u32 2, %s25
      %p899 = scmp.lt.s32.totalorder %s898, 7
      %s900 = scalar_select %p899, %s898, 7
      %s901 = smul.addr %s900, 8
      %s902 = scalar_lea.vmem %s10, %s901
      %s903 = smul.u32 2, %s25
      %p904 = scmp.lt.s32.totalorder %s903, 7
      %s905 = scalar_select %p904, %s903, 7
      %s906 = smul.addr %s905, 8
      %s907 = scalar_lea.vmem %s11, %s906
      %s908 = smul.u32 2, %s25
      %p909 = scmp.lt.s32.totalorder %s908, 7
      %s910 = scalar_select %p909, %s908, 7
      %s911 = smul.addr %s910, 8
      %s912 = scalar_lea.vmem %s12, %s911
      %s913 = smul.u32 2, %s25
      %p914 = scmp.lt.s32.totalorder %s913, 7
      %s915 = scalar_select %p914, %s913, 7
      %s916 = smul.addr %s915, 8
      %s917 = scalar_lea.vmem %s13, %s916
      // Predicated region
      $region61: #{tpu_custom_call.1} parent=59 // pred_check
        %p918 = pneg %p263
      $region62: #{tpu_custom_call.1} parent=59 // pred_check_branch
        %920 = sbr.rel (%p918) target = $region64
      $region63: #{tpu_custom_call.1} parent=59 // pred_region
        %s921 = smul.u32 2, %s25
      $region64: #{tpu_custom_call.1} parent=59 // pred_fallthru
        _
      // Predicated region
      $region65: #{tpu_custom_call.1} parent=59 // pred_check
        %p922 = pneg %p289
      $region66: #{tpu_custom_call.1} parent=59 // pred_check_branch
        %924 = sbr.rel (%p922) target = $region68
      $region67: #{tpu_custom_call.1} parent=59 // pred_region
        %s925 = smul.u32 2, %s25
      $region68: #{tpu_custom_call.1} parent=59 // pred_fallthru
        _
      // Predicated region
      $region69: #{tpu_custom_call.1} parent=59 // pred_check
        %p926 = pneg %p315
      $region70: #{tpu_custom_call.1} parent=59 // pred_check_branch
        %928 = sbr.rel (%p926) target = $region72
      $region71: #{tpu_custom_call.1} parent=59 // pred_region
        %s929 = smul.u32 2, %s25
      $region72: #{tpu_custom_call.1} parent=59 // pred_fallthru
        _
      // Predicated region
      $region73: #{tpu_custom_call.1} parent=59 // pred_check
        %p930 = pneg %p341
      $region74: #{tpu_custom_call.1} parent=59 // pred_check_branch
        %932 = sbr.rel (%p930) target = $region76
      $region75: #{tpu_custom_call.1} parent=59 // pred_region
        %s933 = smul.u32 2, %s25
      $region76: #{tpu_custom_call.1} parent=59 // pred_fallthru
        _
    $region60: #{tpu_custom_call.1} parent=5 // pred_fallthru
      _
    %p934 = scmp.le.s32.totalorder 2, %s20
    // Predicated region
    $region77: #{tpu_custom_call.1} parent=5 // pred_check
      %p935 = pneg %p934
    $region78: #{tpu_custom_call.1} parent=5 // pred_check_branch
      %937 = sbr.rel (%p935) target = $region80
    $region79: #{tpu_custom_call.1} parent=5 // pred_region
      %s938 = ssub.s32 %s20, 2
      // Predicated region
      $region81: #{tpu_custom_call.1} parent=79 // pred_check
        %p939 = pneg %p269
      $region82: #{tpu_custom_call.1} parent=79 // pred_check_branch
        %941 = sbr.rel (%p939) target = $region84
      $region83: #{tpu_custom_call.1} parent=79 // pred_region
        %s942 = smul.u32 2, %s26
        %p943 = scmp.lt.s32.totalorder %s942, 7
        %s944 = scalar_select %p943, %s942, 7
        %s945 = smul.addr %s944, 8
        %s946 = scalar_lea.vmem %s10, %s945
      $region84: #{tpu_custom_call.1} parent=79 // pred_fallthru
        _
      // Predicated region
      $region85: #{tpu_custom_call.1} parent=79 // pred_check
        %p947 = pneg %p295
      $region86: #{tpu_custom_call.1} parent=79 // pred_check_branch
        %949 = sbr.rel (%p947) target = $region88
      $region87: #{tpu_custom_call.1} parent=79 // pred_region
        %s950 = smul.u32 2, %s26
        %p951 = scmp.lt.s32.totalorder %s950, 7
        %s952 = scalar_select %p951, %s950, 7
        %s953 = smul.addr %s952, 8
        %s954 = scalar_lea.vmem %s11, %s953
      $region88: #{tpu_custom_call.1} parent=79 // pred_fallthru
        _
      // Predicated region
      $region89: #{tpu_custom_call.1} parent=79 // pred_check
        %p955 = pneg %p321
      $region90: #{tpu_custom_call.1} parent=79 // pred_check_branch
        %957 = sbr.rel (%p955) target = $region92
      $region91: #{tpu_custom_call.1} parent=79 // pred_region
        %s958 = smul.u32 2, %s26
        %p959 = scmp.lt.s32.totalorder %s958, 7
        %s960 = scalar_select %p959, %s958, 7
        %s961 = smul.addr %s960, 8
        %s962 = scalar_lea.vmem %s12, %s961
      $region92: #{tpu_custom_call.1} parent=79 // pred_fallthru
        _
      // Predicated region
      $region93: #{tpu_custom_call.1} parent=79 // pred_check
        %p963 = pneg %p347
      $region94: #{tpu_custom_call.1} parent=79 // pred_check_branch
        %965 = sbr.rel (%p963) target = $region96
      $region95: #{tpu_custom_call.1} parent=79 // pred_region
        %s966 = smul.u32 2, %s26
        %p967 = scmp.lt.s32.totalorder %s966, 7
        %s968 = scalar_select %p967, %s966, 7
        %s969 = smul.addr %s968, 8
        %s970 = scalar_lea.vmem %s13, %s969
      $region96: #{tpu_custom_call.1} parent=79 // pred_fallthru
        _
    $region80: #{tpu_custom_call.1} parent=5 // pred_fallthru
      _
  $region6: #{tpu_custom_call.1} parent=0 // loop_footer
    %s24 = sadd.s32 1, %s20
  $region7: #{tpu_custom_call.1} parent=0 // loop_footer_branch
    %19 = sbr.rel target = $region3
  $region8: #{tpu_custom_call.1} parent=0 // loop_exit
    _

</llo_original>
